<compile_context>
chip_gen: v5e
topology: v5e:2x2
jax: 0.10.0
libtpu: 0.0.40
codegen_flags: <defaults>
</compile_context>

<pallas_src>
import jax
import jax.numpy as jnp
from jax.experimental import pallas as pl
from jax.experimental.pallas import tpu as pltpu


def _ru8(n: int) -> int:
    """Round up to a multiple of 8 (sublane alignment)."""
    return ((n + 7) // 8) * 8


def _slab_offsets(I: int, H: int):
    """Row offsets of each section inside the packed weight slab."""
    off_wf = 0                      # rows [0, I)        : fused  w1 @ w_ih  (g cols *2)
    off_bf = _ru8(off_wf + I)       # row  off_bf        : fused  bias       (g cols *2)
    off_whh = _ru8(off_bf + 1)      # rows [off_whh, +H) : w_hh              (g cols *2)
    off_w2 = _ru8(off_whh + H)      # row  off_w2        : linear_2 weight as a row (lanes 0:H)
    off_b2 = off_w2 + 1             # row  off_b2        : linear_2 bias in lane 0
    rows = _ru8(off_b2 + 1)
    return off_wf, off_bf, off_whh, off_w2, off_b2, rows


def _make_lstm2_kernel(T: int, B: int, B_pad: int, I: int, H: int):
    """Build the kernel with all shapes / slab offsets baked in as constants."""
    _, off_bf, off_whh, off_w2, off_b2, _ = _slab_offsets(I, H)

    def kernel(x_ref, slab_ref, out_ref):
        # x_ref    : (T*B_pad, I)  time-major, batch padded to 8; row t*B_pad+b == x[b, t]
        # slab_ref : (rows, 4H)    packed weights (see _slab_offsets)
        # out_ref  : (B, 1)

        # ---- hoisted, 8-row-aligned static views of the weight slab ---------
        wf = slab_ref[0:I, :]                          # (I, 4H)  fused w1@w_ih (g cols pre-scaled)
        bf = slab_ref[off_bf:off_bf + 1, :]            # (1, 4H)  fused bias    (g cols pre-scaled)
        whh = slab_ref[off_whh:off_whh + H, :]         # (H, 4H)  w_hh          (g cols pre-scaled)
        w2r = slab_ref[off_w2:off_w2 + 1, 0:H]         # (1, H)   linear_2 weight row
        b2 = slab_ref[off_b2:off_b2 + 1, 0:1]          # (1, 1)   linear_2 bias

        # ---- all input-dependent work for every timestep: ONE MXU matmul,
        #      entirely off the serial h->c->h chain --------------------------
        gx = (jnp.dot(x_ref[...], wf, preferred_element_type=jnp.float32)
              + bf)                                    # (T*B_pad, 4H)

        h = jnp.zeros((B_pad, H), jnp.float32)
        c = jnp.zeros((B_pad, H), jnp.float32)

        # ---- fully unrolled recurrence: one MXU matmul + 2 EUP pushes / step.
        #      PyTorch gate order: i, f, g, o.  g columns were pre-scaled by 2,
        #      so tanh(g_pre) == 2*sigmoid(2*g_pre) - 1 (VPU fixup only). ------
        for t in range(T):
            gates = gx[t * B_pad:(t + 1) * B_pad, :] + jnp.dot(
                h, whh, preferred_element_type=jnp.float32)        # (B_pad, 4H)
            sg = jax.nn.sigmoid(gates)                              # single EUP push
            i_g = sg[:, 0 * H:1 * H]
            f_g = sg[:, 1 * H:2 * H]
            g_g = 2.0 * sg[:, 2 * H:3 * H] - 1.0                    # == tanh(original g pre-act)
            o_g = sg[:, 3 * H:4 * H]
            c = f_g * c + i_g * g_g
            h = o_g * jnp.tanh(c)                                   # second EUP push

        # linear_2 on the final hidden state (== h_out.view(-1, H) for num_layers=1):
        # tiny (H,1) output -> VPU multiply + lane reduce instead of an MXU matmul.
        out = jnp.sum(h * w2r, axis=-1, keepdims=True) + b2         # (B_pad, 1)
        out_ref[...] = out[:B, :]

    return kernel


def prepare_params(params):
    """One-time parameter prep (NOT in the per-call path).

    Fuses linear_1 into the LSTM input projection, pre-scales the g-gate
    columns by 2 for the single-sigmoid gate trick, and packs everything into
    a single lane-padded f32 slab with 8-row-aligned sections.
    """
    I, _E = params["w1"].shape
    H = params["w_hh"].shape[0]
    hi = jax.lax.Precision.HIGHEST

    w_fused = jnp.dot(params["w1"], params["w_ih"], precision=hi,
                      preferred_element_type=jnp.float32)                    # (I, 4H)
    b_fused = (jnp.dot(params["b1"], params["w_ih"], precision=hi,
                       preferred_element_type=jnp.float32)
               + params["b_lstm"])                                           # (1, 4H)

    # Pre-scale ONLY the g-gate columns (2H:3H) by 2 (tanh(x) = 2*sigmoid(2x)-1).
    w_fused = w_fused.at[:, 2 * H:3 * H].multiply(2.0)
    b_fused = b_fused.at[:, 2 * H:3 * H].multiply(2.0)
    whh_s = params["w_hh"].at[:, 2 * H:3 * H].multiply(2.0)

    off_wf, off_bf, off_whh, off_w2, off_b2, rows = _slab_offsets(I, H)
    slab = jnp.zeros((rows, 4 * H), jnp.float32)
    slab = slab.at[off_wf:off_wf + I, :].set(w_fused)
    slab = slab.at[off_bf:off_bf + 1, :].set(b_fused)
    slab = slab.at[off_whh:off_whh + H, :].set(whh_s)
    slab = slab.at[off_w2, 0:H].set(params["w2"][:, 0])
    slab = slab.at[off_b2, 0].set(params["b2"][0, 0])
    return slab


@jax.jit
def basic_lstm2_forward(x, slab):
    """x: (B, T, input_size) float32, slab from prepare_params() -> (B, 1) float32."""
    B, T, I = x.shape
    H = slab.shape[1] // 4
    B_pad = max(8, _ru8(B))

    # time-major + batch padded to 8 sublanes, flattened so the kernel's bulk
    # projection is one whole-vreg-aligned matmul (row t*B_pad + b == x[b, t]).
    x_tm = jnp.transpose(x, (1, 0, 2))                                 # (T, B, I)
    x_tm = jnp.pad(x_tm, ((0, 0), (0, B_pad - B), (0, 0)))             # (T, B_pad, I)
    x_tm = x_tm.reshape(T * B_pad, I)

    vspec = pl.BlockSpec(memory_space=pltpu.MemorySpace.VMEM)
    out = pl.pallas_call(
        _make_lstm2_kernel(T, B, B_pad, I, H),
        out_shape=jax.ShapeDtypeStruct((B, 1), jnp.float32),
        in_specs=[vspec, vspec],
        out_specs=vspec,
    )(x_tm, slab)
    return out


def reference_forward(x, params):
    """Pure-JAX reference mirroring the torch semantics (unfused path)."""
    B, T, _ = x.shape
    H = params["w_hh"].shape[0]
    e = jnp.einsum("bti,ie->bte", x, params["w1"]) + params["b1"][0]
    h = jnp.zeros((B, H), jnp.float32)
    c = jnp.zeros((B, H), jnp.float32)
    for t in range(T):
        gates = e[:, t, :] @ params["w_ih"] + h @ params["w_hh"] + params["b_lstm"][0]
        i_g = jax.nn.sigmoid(gates[:, 0 * H:1 * H])
        f_g = jax.nn.sigmoid(gates[:, 1 * H:2 * H])
        g_g = jnp.tanh(gates[:, 2 * H:3 * H])
        o_g = jax.nn.sigmoid(gates[:, 3 * H:4 * H])
        c = f_g * c + i_g * g_g
        h = o_g * jnp.tanh(c)
    return h @ params["w2"] + params["b2"][0]


def init_params(key, input_size, feature_embedding_size, hidden_size):
    ks = jax.random.split(key, 8)
    I, E, H = input_size, feature_embedding_size, hidden_size
    scale = 0.1
    return {
        "w1": jax.random.normal(ks[0], (I, E), jnp.float32) * scale,
        "b1": jax.random.normal(ks[1], (1, E), jnp.float32) * scale,
        "w_ih": jax.random.normal(ks[2], (E, 4 * H), jnp.float32) * scale,
        "w_hh": jax.random.normal(ks[3], (H, 4 * H), jnp.float32) * scale,
        "b_lstm": jax.random.normal(ks[4], (1, 4 * H), jnp.float32) * scale,  # b_ih + b_hh folded
        "w2": jax.random.normal(ks[5], (H, 1), jnp.float32) * scale,
        "b2": jax.random.normal(ks[6], (1, 1), jnp.float32) * scale,
    }


if __name__ == "__main__":
    # Shapes implied by the module's forward:
    #   x: (batch, seq, input_size); feature_embedding_size=E; hidden_size=16.
    B, T = 2, 8
    input_size = 4
    feature_embedding_size = 8
    hidden_size = 16

    key = jax.random.PRNGKey(0)
    k_x, k_p = jax.random.split(key)
    x = jax.random.normal(k_x, (B, T, input_size), jnp.float32)
    params = init_params(k_p, input_size, feature_embedding_size, hidden_size)

    slab = prepare_params(params)          # one-time weight fusion + packing
    out = basic_lstm2_forward(x, slab)
    out = jax.block_until_ready(out)

    ref = reference_forward(x, params)
    assert out.shape == (B, 1)
    assert jnp.allclose(out, ref, atol=1e-5, rtol=1e-5), (out, ref)

    print("KERNEL_OK")
</pallas_src>

<mosaic_0001>
module attributes {stable_mosaic.version = 11 : i64} {
  func.func @kernel(%arg0: memref<64x4xf32, #tpu.memory_space<vmem>>, %arg1: memref<40x64xf32, #tpu.memory_space<vmem>>, %arg2: memref<2x1xf32, #tpu.memory_space<vmem>>) attributes {dimension_semantics = [], scalar_prefetch = 0 : i64, scratch_operands = 0 : i64, tpu.core_type = #tpu.core_type<tc>} {
    %c0 = arith.constant 0 : index
    %c0_0 = arith.constant 0 : index
    %0 = vector.load %arg1[%c0, %c0_0] : memref<40x64xf32, #tpu.memory_space<vmem>>, vector<4x64xf32>
    %c8 = arith.constant 8 : index
    %c0_1 = arith.constant 0 : index
    %1 = vector.load %arg1[%c8, %c0_1] : memref<40x64xf32, #tpu.memory_space<vmem>>, vector<1x64xf32>
    %c16 = arith.constant 16 : index
    %c0_2 = arith.constant 0 : index
    %2 = vector.load %arg1[%c16, %c0_2] : memref<40x64xf32, #tpu.memory_space<vmem>>, vector<16x64xf32>
    %c32 = arith.constant 32 : index
    %c0_3 = arith.constant 0 : index
    %3 = vector.load %arg1[%c32, %c0_3] : memref<40x64xf32, #tpu.memory_space<vmem>>, vector<1x16xf32>
    %c33 = arith.constant 33 : index
    %c0_4 = arith.constant 0 : index
    %4 = vector.load %arg1[%c33, %c0_4] : memref<40x64xf32, #tpu.memory_space<vmem>>, vector<1x1xf32>
    %c0_5 = arith.constant 0 : index
    %c0_6 = arith.constant 0 : index
    %5 = vector.load %arg0[%c0_5, %c0_6] : memref<64x4xf32, #tpu.memory_space<vmem>>, vector<64x4xf32>
    %cst = arith.constant dense<0.000000e+00> : vector<64x64xf32>
    %6 = tpu.matmul %5, %0, %cst {dimension_numbers = #tpu.dot_dimension_numbers<[1], [0], [0], [1], [0, 0, 1, 1], [], []>} : vector<64x4xf32>, vector<4x64xf32>, vector<64x64xf32> -> vector<64x64xf32>
    %7 = vector.broadcast %1 : vector<1x64xf32> to vector<64x64xf32>
    %8 = arith.addf %6, %7 : vector<64x64xf32>
    %cst_7 = arith.constant 0.000000e+00 : f32
    %9 = vector.broadcast %cst_7 : f32 to vector<8x16xf32>
    %cst_8 = arith.constant 0.000000e+00 : f32
    %10 = vector.broadcast %cst_8 : f32 to vector<8x16xf32>
    %11 = vector.extract_strided_slice %8 {offsets = [0, 0], sizes = [8, 64], strides = [1, 1]} : vector<64x64xf32> to vector<8x64xf32>
    %cst_9 = arith.constant dense<0.000000e+00> : vector<8x64xf32>
    %12 = tpu.matmul %9, %2, %cst_9 {dimension_numbers = #tpu.dot_dimension_numbers<[1], [0], [0], [1], [0, 0, 1, 1], [], []>} : vector<8x16xf32>, vector<16x64xf32>, vector<8x64xf32> -> vector<8x64xf32>
    %13 = arith.addf %11, %12 : vector<8x64xf32>
    %14 = arith.negf %13 : vector<8x64xf32>
    %15 = math.exp %14 : vector<8x64xf32>
    %cst_10 = arith.constant 1.000000e+00 : f32
    %16 = vector.broadcast %cst_10 : f32 to vector<8x64xf32>
    %17 = arith.addf %16, %15 : vector<8x64xf32>
    %18 = arith.divf %16, %17 : vector<8x64xf32>
    %19 = vector.extract_strided_slice %18 {offsets = [0, 0], sizes = [8, 16], strides = [1, 1]} : vector<8x64xf32> to vector<8x16xf32>
    %20 = vector.extract_strided_slice %18 {offsets = [0, 16], sizes = [8, 16], strides = [1, 1]} : vector<8x64xf32> to vector<8x16xf32>
    %21 = vector.extract_strided_slice %18 {offsets = [0, 32], sizes = [8, 16], strides = [1, 1]} : vector<8x64xf32> to vector<8x16xf32>
    %cst_11 = arith.constant 2.000000e+00 : f32
    %22 = vector.broadcast %cst_11 : f32 to vector<8x16xf32>
    %23 = arith.mulf %22, %21 : vector<8x16xf32>
    %cst_12 = arith.constant 1.000000e+00 : f32
    %24 = vector.broadcast %cst_12 : f32 to vector<8x16xf32>
    %25 = arith.subf %23, %24 : vector<8x16xf32>
    %26 = vector.extract_strided_slice %18 {offsets = [0, 48], sizes = [8, 16], strides = [1, 1]} : vector<8x64xf32> to vector<8x16xf32>
    %27 = arith.mulf %20, %10 : vector<8x16xf32>
    %28 = arith.mulf %19, %25 : vector<8x16xf32>
    %29 = arith.addf %27, %28 : vector<8x16xf32>
    %30 = math.tanh %29 : vector<8x16xf32>
    %31 = arith.mulf %26, %30 : vector<8x16xf32>
    %32 = vector.extract_strided_slice %8 {offsets = [8, 0], sizes = [8, 64], strides = [1, 1]} : vector<64x64xf32> to vector<8x64xf32>
    %cst_13 = arith.constant dense<0.000000e+00> : vector<8x64xf32>
    %33 = tpu.matmul %31, %2, %cst_13 {dimension_numbers = #tpu.dot_dimension_numbers<[1], [0], [0], [1], [0, 0, 1, 1], [], []>} : vector<8x16xf32>, vector<16x64xf32>, vector<8x64xf32> -> vector<8x64xf32>
    %34 = arith.addf %32, %33 : vector<8x64xf32>
    %35 = arith.negf %34 : vector<8x64xf32>
    %36 = math.exp %35 : vector<8x64xf32>
    %cst_14 = arith.constant 1.000000e+00 : f32
    %37 = vector.broadcast %cst_14 : f32 to vector<8x64xf32>
    %38 = arith.addf %37, %36 : vector<8x64xf32>
    %39 = arith.divf %37, %38 : vector<8x64xf32>
    %40 = vector.extract_strided_slice %39 {offsets = [0, 0], sizes = [8, 16], strides = [1, 1]} : vector<8x64xf32> to vector<8x16xf32>
    %41 = vector.extract_strided_slice %39 {offsets = [0, 16], sizes = [8, 16], strides = [1, 1]} : vector<8x64xf32> to vector<8x16xf32>
    %42 = vector.extract_strided_slice %39 {offsets = [0, 32], sizes = [8, 16], strides = [1, 1]} : vector<8x64xf32> to vector<8x16xf32>
    %cst_15 = arith.constant 2.000000e+00 : f32
    %43 = vector.broadcast %cst_15 : f32 to vector<8x16xf32>
    %44 = arith.mulf %43, %42 : vector<8x16xf32>
    %cst_16 = arith.constant 1.000000e+00 : f32
    %45 = vector.broadcast %cst_16 : f32 to vector<8x16xf32>
    %46 = arith.subf %44, %45 : vector<8x16xf32>
    %47 = vector.extract_strided_slice %39 {offsets = [0, 48], sizes = [8, 16], strides = [1, 1]} : vector<8x64xf32> to vector<8x16xf32>
    %48 = arith.mulf %41, %29 : vector<8x16xf32>
    %49 = arith.mulf %40, %46 : vector<8x16xf32>
    %50 = arith.addf %48, %49 : vector<8x16xf32>
    %51 = math.tanh %50 : vector<8x16xf32>
    %52 = arith.mulf %47, %51 : vector<8x16xf32>
    %53 = vector.extract_strided_slice %8 {offsets = [16, 0], sizes = [8, 64], strides = [1, 1]} : vector<64x64xf32> to vector<8x64xf32>
    %cst_17 = arith.constant dense<0.000000e+00> : vector<8x64xf32>
    %54 = tpu.matmul %52, %2, %cst_17 {dimension_numbers = #tpu.dot_dimension_numbers<[1], [0], [0], [1], [0, 0, 1, 1], [], []>} : vector<8x16xf32>, vector<16x64xf32>, vector<8x64xf32> -> vector<8x64xf32>
    %55 = arith.addf %53, %54 : vector<8x64xf32>
    %56 = arith.negf %55 : vector<8x64xf32>
    %57 = math.exp %56 : vector<8x64xf32>
    %cst_18 = arith.constant 1.000000e+00 : f32
    %58 = vector.broadcast %cst_18 : f32 to vector<8x64xf32>
    %59 = arith.addf %58, %57 : vector<8x64xf32>
    %60 = arith.divf %58, %59 : vector<8x64xf32>
    %61 = vector.extract_strided_slice %60 {offsets = [0, 0], sizes = [8, 16], strides = [1, 1]} : vector<8x64xf32> to vector<8x16xf32>
    %62 = vector.extract_strided_slice %60 {offsets = [0, 16], sizes = [8, 16], strides = [1, 1]} : vector<8x64xf32> to vector<8x16xf32>
    %63 = vector.extract_strided_slice %60 {offsets = [0, 32], sizes = [8, 16], strides = [1, 1]} : vector<8x64xf32> to vector<8x16xf32>
    %cst_19 = arith.constant 2.000000e+00 : f32
    %64 = vector.broadcast %cst_19 : f32 to vector<8x16xf32>
    %65 = arith.mulf %64, %63 : vector<8x16xf32>
    %cst_20 = arith.constant 1.000000e+00 : f32
    %66 = vector.broadcast %cst_20 : f32 to vector<8x16xf32>
    %67 = arith.subf %65, %66 : vector<8x16xf32>
    %68 = vector.extract_strided_slice %60 {offsets = [0, 48], sizes = [8, 16], strides = [1, 1]} : vector<8x64xf32> to vector<8x16xf32>
    %69 = arith.mulf %62, %50 : vector<8x16xf32>
    %70 = arith.mulf %61, %67 : vector<8x16xf32>
    %71 = arith.addf %69, %70 : vector<8x16xf32>
    %72 = math.tanh %71 : vector<8x16xf32>
    %73 = arith.mulf %68, %72 : vector<8x16xf32>
    %74 = vector.extract_strided_slice %8 {offsets = [24, 0], sizes = [8, 64], strides = [1, 1]} : vector<64x64xf32> to vector<8x64xf32>
    %cst_21 = arith.constant dense<0.000000e+00> : vector<8x64xf32>
    %75 = tpu.matmul %73, %2, %cst_21 {dimension_numbers = #tpu.dot_dimension_numbers<[1], [0], [0], [1], [0, 0, 1, 1], [], []>} : vector<8x16xf32>, vector<16x64xf32>, vector<8x64xf32> -> vector<8x64xf32>
    %76 = arith.addf %74, %75 : vector<8x64xf32>
    %77 = arith.negf %76 : vector<8x64xf32>
    %78 = math.exp %77 : vector<8x64xf32>
    %cst_22 = arith.constant 1.000000e+00 : f32
    %79 = vector.broadcast %cst_22 : f32 to vector<8x64xf32>
    %80 = arith.addf %79, %78 : vector<8x64xf32>
    %81 = arith.divf %79, %80 : vector<8x64xf32>
    %82 = vector.extract_strided_slice %81 {offsets = [0, 0], sizes = [8, 16], strides = [1, 1]} : vector<8x64xf32> to vector<8x16xf32>
    %83 = vector.extract_strided_slice %81 {offsets = [0, 16], sizes = [8, 16], strides = [1, 1]} : vector<8x64xf32> to vector<8x16xf32>
    %84 = vector.extract_strided_slice %81 {offsets = [0, 32], sizes = [8, 16], strides = [1, 1]} : vector<8x64xf32> to vector<8x16xf32>
    %cst_23 = arith.constant 2.000000e+00 : f32
    %85 = vector.broadcast %cst_23 : f32 to vector<8x16xf32>
    %86 = arith.mulf %85, %84 : vector<8x16xf32>
    %cst_24 = arith.constant 1.000000e+00 : f32
    %87 = vector.broadcast %cst_24 : f32 to vector<8x16xf32>
    %88 = arith.subf %86, %87 : vector<8x16xf32>
    %89 = vector.extract_strided_slice %81 {offsets = [0, 48], sizes = [8, 16], strides = [1, 1]} : vector<8x64xf32> to vector<8x16xf32>
    %90 = arith.mulf %83, %71 : vector<8x16xf32>
    %91 = arith.mulf %82, %88 : vector<8x16xf32>
    %92 = arith.addf %90, %91 : vector<8x16xf32>
    %93 = math.tanh %92 : vector<8x16xf32>
    %94 = arith.mulf %89, %93 : vector<8x16xf32>
    %95 = vector.extract_strided_slice %8 {offsets = [32, 0], sizes = [8, 64], strides = [1, 1]} : vector<64x64xf32> to vector<8x64xf32>
    %cst_25 = arith.constant dense<0.000000e+00> : vector<8x64xf32>
    %96 = tpu.matmul %94, %2, %cst_25 {dimension_numbers = #tpu.dot_dimension_numbers<[1], [0], [0], [1], [0, 0, 1, 1], [], []>} : vector<8x16xf32>, vector<16x64xf32>, vector<8x64xf32> -> vector<8x64xf32>
    %97 = arith.addf %95, %96 : vector<8x64xf32>
    %98 = arith.negf %97 : vector<8x64xf32>
    %99 = math.exp %98 : vector<8x64xf32>
    %cst_26 = arith.constant 1.000000e+00 : f32
    %100 = vector.broadcast %cst_26 : f32 to vector<8x64xf32>
    %101 = arith.addf %100, %99 : vector<8x64xf32>
    %102 = arith.divf %100, %101 : vector<8x64xf32>
    %103 = vector.extract_strided_slice %102 {offsets = [0, 0], sizes = [8, 16], strides = [1, 1]} : vector<8x64xf32> to vector<8x16xf32>
    %104 = vector.extract_strided_slice %102 {offsets = [0, 16], sizes = [8, 16], strides = [1, 1]} : vector<8x64xf32> to vector<8x16xf32>
    %105 = vector.extract_strided_slice %102 {offsets = [0, 32], sizes = [8, 16], strides = [1, 1]} : vector<8x64xf32> to vector<8x16xf32>
    %cst_27 = arith.constant 2.000000e+00 : f32
    %106 = vector.broadcast %cst_27 : f32 to vector<8x16xf32>
    %107 = arith.mulf %106, %105 : vector<8x16xf32>
    %cst_28 = arith.constant 1.000000e+00 : f32
    %108 = vector.broadcast %cst_28 : f32 to vector<8x16xf32>
    %109 = arith.subf %107, %108 : vector<8x16xf32>
    %110 = vector.extract_strided_slice %102 {offsets = [0, 48], sizes = [8, 16], strides = [1, 1]} : vector<8x64xf32> to vector<8x16xf32>
    %111 = arith.mulf %104, %92 : vector<8x16xf32>
    %112 = arith.mulf %103, %109 : vector<8x16xf32>
    %113 = arith.addf %111, %112 : vector<8x16xf32>
    %114 = math.tanh %113 : vector<8x16xf32>
    %115 = arith.mulf %110, %114 : vector<8x16xf32>
    %116 = vector.extract_strided_slice %8 {offsets = [40, 0], sizes = [8, 64], strides = [1, 1]} : vector<64x64xf32> to vector<8x64xf32>
    %cst_29 = arith.constant dense<0.000000e+00> : vector<8x64xf32>
    %117 = tpu.matmul %115, %2, %cst_29 {dimension_numbers = #tpu.dot_dimension_numbers<[1], [0], [0], [1], [0, 0, 1, 1], [], []>} : vector<8x16xf32>, vector<16x64xf32>, vector<8x64xf32> -> vector<8x64xf32>
    %118 = arith.addf %116, %117 : vector<8x64xf32>
    %119 = arith.negf %118 : vector<8x64xf32>
    %120 = math.exp %119 : vector<8x64xf32>
    %cst_30 = arith.constant 1.000000e+00 : f32
    %121 = vector.broadcast %cst_30 : f32 to vector<8x64xf32>
    %122 = arith.addf %121, %120 : vector<8x64xf32>
    %123 = arith.divf %121, %122 : vector<8x64xf32>
    %124 = vector.extract_strided_slice %123 {offsets = [0, 0], sizes = [8, 16], strides = [1, 1]} : vector<8x64xf32> to vector<8x16xf32>
    %125 = vector.extract_strided_slice %123 {offsets = [0, 16], sizes = [8, 16], strides = [1, 1]} : vector<8x64xf32> to vector<8x16xf32>
    %126 = vector.extract_strided_slice %123 {offsets = [0, 32], sizes = [8, 16], strides = [1, 1]} : vector<8x64xf32> to vector<8x16xf32>
    %cst_31 = arith.constant 2.000000e+00 : f32
    %127 = vector.broadcast %cst_31 : f32 to vector<8x16xf32>
    %128 = arith.mulf %127, %126 : vector<8x16xf32>
    %cst_32 = arith.constant 1.000000e+00 : f32
    %129 = vector.broadcast %cst_32 : f32 to vector<8x16xf32>
    %130 = arith.subf %128, %129 : vector<8x16xf32>
    %131 = vector.extract_strided_slice %123 {offsets = [0, 48], sizes = [8, 16], strides = [1, 1]} : vector<8x64xf32> to vector<8x16xf32>
    %132 = arith.mulf %125, %113 : vector<8x16xf32>
    %133 = arith.mulf %124, %130 : vector<8x16xf32>
    %134 = arith.addf %132, %133 : vector<8x16xf32>
    %135 = math.tanh %134 : vector<8x16xf32>
    %136 = arith.mulf %131, %135 : vector<8x16xf32>
    %137 = vector.extract_strided_slice %8 {offsets = [48, 0], sizes = [8, 64], strides = [1, 1]} : vector<64x64xf32> to vector<8x64xf32>
    %cst_33 = arith.constant dense<0.000000e+00> : vector<8x64xf32>
    %138 = tpu.matmul %136, %2, %cst_33 {dimension_numbers = #tpu.dot_dimension_numbers<[1], [0], [0], [1], [0, 0, 1, 1], [], []>} : vector<8x16xf32>, vector<16x64xf32>, vector<8x64xf32> -> vector<8x64xf32>
    %139 = arith.addf %137, %138 : vector<8x64xf32>
    %140 = arith.negf %139 : vector<8x64xf32>
    %141 = math.exp %140 : vector<8x64xf32>
    %cst_34 = arith.constant 1.000000e+00 : f32
    %142 = vector.broadcast %cst_34 : f32 to vector<8x64xf32>
    %143 = arith.addf %142, %141 : vector<8x64xf32>
    %144 = arith.divf %142, %143 : vector<8x64xf32>
    %145 = vector.extract_strided_slice %144 {offsets = [0, 0], sizes = [8, 16], strides = [1, 1]} : vector<8x64xf32> to vector<8x16xf32>
    %146 = vector.extract_strided_slice %144 {offsets = [0, 16], sizes = [8, 16], strides = [1, 1]} : vector<8x64xf32> to vector<8x16xf32>
    %147 = vector.extract_strided_slice %144 {offsets = [0, 32], sizes = [8, 16], strides = [1, 1]} : vector<8x64xf32> to vector<8x16xf32>
    %cst_35 = arith.constant 2.000000e+00 : f32
    %148 = vector.broadcast %cst_35 : f32 to vector<8x16xf32>
    %149 = arith.mulf %148, %147 : vector<8x16xf32>
    %cst_36 = arith.constant 1.000000e+00 : f32
    %150 = vector.broadcast %cst_36 : f32 to vector<8x16xf32>
    %151 = arith.subf %149, %150 : vector<8x16xf32>
    %152 = vector.extract_strided_slice %144 {offsets = [0, 48], sizes = [8, 16], strides = [1, 1]} : vector<8x64xf32> to vector<8x16xf32>
    %153 = arith.mulf %146, %134 : vector<8x16xf32>
    %154 = arith.mulf %145, %151 : vector<8x16xf32>
    %155 = arith.addf %153, %154 : vector<8x16xf32>
    %156 = math.tanh %155 : vector<8x16xf32>
    %157 = arith.mulf %152, %156 : vector<8x16xf32>
    %158 = vector.extract_strided_slice %8 {offsets = [56, 0], sizes = [8, 64], strides = [1, 1]} : vector<64x64xf32> to vector<8x64xf32>
    %cst_37 = arith.constant dense<0.000000e+00> : vector<8x64xf32>
    %159 = tpu.matmul %157, %2, %cst_37 {dimension_numbers = #tpu.dot_dimension_numbers<[1], [0], [0], [1], [0, 0, 1, 1], [], []>} : vector<8x16xf32>, vector<16x64xf32>, vector<8x64xf32> -> vector<8x64xf32>
    %160 = arith.addf %158, %159 : vector<8x64xf32>
    %161 = arith.negf %160 : vector<8x64xf32>
    %162 = math.exp %161 : vector<8x64xf32>
    %cst_38 = arith.constant 1.000000e+00 : f32
    %163 = vector.broadcast %cst_38 : f32 to vector<8x64xf32>
    %164 = arith.addf %163, %162 : vector<8x64xf32>
    %165 = arith.divf %163, %164 : vector<8x64xf32>
    %166 = vector.extract_strided_slice %165 {offsets = [0, 0], sizes = [8, 16], strides = [1, 1]} : vector<8x64xf32> to vector<8x16xf32>
    %167 = vector.extract_strided_slice %165 {offsets = [0, 16], sizes = [8, 16], strides = [1, 1]} : vector<8x64xf32> to vector<8x16xf32>
    %168 = vector.extract_strided_slice %165 {offsets = [0, 32], sizes = [8, 16], strides = [1, 1]} : vector<8x64xf32> to vector<8x16xf32>
    %cst_39 = arith.constant 2.000000e+00 : f32
    %169 = vector.broadcast %cst_39 : f32 to vector<8x16xf32>
    %170 = arith.mulf %169, %168 : vector<8x16xf32>
    %cst_40 = arith.constant 1.000000e+00 : f32
    %171 = vector.broadcast %cst_40 : f32 to vector<8x16xf32>
    %172 = arith.subf %170, %171 : vector<8x16xf32>
    %173 = vector.extract_strided_slice %165 {offsets = [0, 48], sizes = [8, 16], strides = [1, 1]} : vector<8x64xf32> to vector<8x16xf32>
    %174 = arith.mulf %167, %155 : vector<8x16xf32>
    %175 = arith.mulf %166, %172 : vector<8x16xf32>
    %176 = arith.addf %174, %175 : vector<8x16xf32>
    %177 = math.tanh %176 : vector<8x16xf32>
    %178 = arith.mulf %173, %177 : vector<8x16xf32>
    %179 = vector.broadcast %3 : vector<1x16xf32> to vector<8x16xf32>
    %180 = arith.mulf %178, %179 : vector<8x16xf32>
    %cst_41 = arith.constant dense<0.000000e+00> : vector<8xf32>
    %181 = vector.multi_reduction <add>, %180, %cst_41 [1] : vector<8x16xf32> to vector<8xf32>
    %182 = vector.shape_cast %181 : vector<8xf32> to vector<8x1xf32>
    %183 = vector.broadcast %4 : vector<1x1xf32> to vector<8x1xf32>
    %184 = arith.addf %182, %183 : vector<8x1xf32>
    %185 = vector.extract_strided_slice %184 {offsets = [0, 0], sizes = [2, 1], strides = [1, 1]} : vector<8x1xf32> to vector<2x1xf32>
    %c0_42 = arith.constant 0 : index
    %c0_43 = arith.constant 0 : index
    %186 = vector.load %arg2[%c0_42, %c0_43] : memref<2x1xf32, #tpu.memory_space<vmem>>, vector<2x1xf32>
    tpu.vector_store %arg2[%c0_42, %c0_43], %185 {strides = array<i32>} : memref<2x1xf32, #tpu.memory_space<vmem>>, vector<2x1xf32>,
    return
  }
}

</mosaic_0001>

<llo_original>
// kernel: basic_lstm2_forward.1
$region0: #{basic_lstm2_forward.1}
  #allocation0 [shape = 'u32[]', space=smem, size = 0x4, offset = 0x4, fixed_abs, tag = 'smem constant byte address 0x4 - core index']
  #allocation1 [shape = 'u32[72,128]{1,0:T(1,128)}', space=vmem, size = 0x9000, scoped, tag = 'internal scratch']
  %s0 = inlined_call_operand.vmem [shape: f32[64,4], index: 0, kind: input, shape index: {}]
  %s1 = inlined_call_operand.vmem [shape: f32[40,64], index: 1, kind: input, shape index: {}]
  %s2 = inlined_call_operand.vmem [shape: f32[2,1], index: 2, kind: output, shape index: {}]
  %s3 = sld [smem:[#allocation0]]
  $region18: #{basic_lstm2_forward.1} parent=0
    _
  %s5 = ssub.s32 1, %s3
  %s6 = scalar_select 0, %s5, %s3
  // Predicated region
  $region2: #{basic_lstm2_forward.1} parent=0 // pred_check
    _
  $region3: #{basic_lstm2_forward.1} parent=0 // pred_check_branch
    %8 = sbr.rel (0) target = $region5
  $region4: #{basic_lstm2_forward.1} parent=0 // pred_region
    _
  $region5: #{basic_lstm2_forward.1} parent=0 // pred_fallthru
    _
  // Predicated region
  $region6: #{basic_lstm2_forward.1} parent=0 // pred_check
    _
  $region7: #{basic_lstm2_forward.1} parent=0 // pred_check_branch
    %10 = sbr.rel (0) target = $region9
  $region8: #{basic_lstm2_forward.1} parent=0 // pred_region
    _
  $region9: #{basic_lstm2_forward.1} parent=0 // pred_fallthru
    _
  %v11 = vld [vmem:[%s1] sm:$0xf]
  %v12 = vld [vmem:[%s1 + $0x8] sm:$0x1]
  %v13 = vld [vmem:[%s1 + $0x10] sm:$0xff]
  %v14 = vld [vmem:[%s1 + $0x18] sm:$0xff]
  %v15 = vld [vmem:[%s1 + $0x20] sm:$0x1]
  %v16 = vld [vmem:[%s1 + $0x21] sm:$0x1]
  %v17 = vld [vmem:[%s0] sm:$0xff]
  %v18 = vld [vmem:[%s0 + $0x8] sm:$0xff]
  %v19 = vld [vmem:[%s0 + $0x10] sm:$0xff]
  %v20 = vld [vmem:[%s0 + $0x18] sm:$0xff]
  %v21 = vld [vmem:[%s0 + $0x20] sm:$0xff]
  %v22 = vld [vmem:[%s0 + $0x28] sm:$0xff]
  %v23 = vld [vmem:[%s0 + $0x30] sm:$0xff]
  %v24 = vld [vmem:[%s0 + $0x38] sm:$0xff]
  %v25 = vperm.slane %v12, 0
  %vm26 = vcmask 31744
  %v28 = vsel %vm26, %v17, 0
  %v31 = vsel %vm26, %v18, 0
  %v34 = vsel %vm26, %v19, 0
  %v37 = vsel %vm26, %v20, 0
  %v40 = vsel %vm26, %v21, 0
  %v43 = vsel %vm26, %v22, 0
  %v46 = vsel %vm26, %v23, 0
  %v49 = vsel %vm26, %v24, 0
  %vm51 = vcmask 1043456
  %v53 = vsel %vm51, %v11, 0
  %55 = vmatpush.msra.mxu0 0.0
  %56 = vmatpush.msra.mxu0 0.0
  %57 = vmatpush.msra.mxu0 0.0
  %58 = vmatpush.msra.mxu0 0.0
  %59 = vmatpush.msra.mxu0 0.0
  %60 = vmatpush.msra.mxu0 0.0
  %61 = vmatpush.msra.mxu0 0.0
  %62 = vmatpush.msra.mxu0 0.0
  %63 = vmatpush.msra.mxu0 0.0
  %64 = vmatpush.msra.mxu0 0.0
  %65 = vmatpush.msra.mxu0 0.0
  %66 = vmatpush.msra.mxu0 0.0
  %67 = vmatpush.msra.mxu0 0.0
  %68 = vmatpush.msra.mxu0 0.0
  %69 = vmatpush.msra.mxu0 0.0
  %70 = vmatpush.msra.mxu0 %v53
  %71 = vmatmul.f32.gmra.mxu0 %v28
  %v72 = vpop.f32.mrf.mxu0
  %v73 = vadd.f32 %v25, %v72
  %74 = vmatmul.f32.gmra.mxu0 %v31
  %v75 = vpop.f32.mrf.mxu0
  %v76 = vadd.f32 %v25, %v75
  %77 = vmatmul.f32.gmra.mxu0 %v34
  %v78 = vpop.f32.mrf.mxu0
  %v79 = vadd.f32 %v25, %v78
  %80 = vmatmul.f32.gmra.mxu0 %v37
  %v81 = vpop.f32.mrf.mxu0
  %v82 = vadd.f32 %v25, %v81
  %83 = vmatmul.f32.gmra.mxu0 %v40
  %v84 = vpop.f32.mrf.mxu0
  %v85 = vadd.f32 %v25, %v84
  %86 = vmatmul.f32.gmra.mxu0 %v43
  %v87 = vpop.f32.mrf.mxu0
  %v88 = vadd.f32 %v25, %v87
  %89 = vmatmul.f32.gmra.mxu0 %v46
  %v90 = vpop.f32.mrf.mxu0
  %v91 = vadd.f32 %v25, %v90
  %92 = vmatmul.f32.gmra.mxu0 %v49
  %v93 = vpop.f32.mrf.mxu0
  %v94 = vadd.f32 %v25, %v93
  %95 = vdwg.mxu0
  %vm96 = vcmask 130048
  %v98 = vsel %vm96, 0.0, 0
  %100 = vmatpush.msra.mxu0 0.0
  %101 = vmatpush.msra.mxu0 0.0
  %102 = vmatpush.msra.mxu0 0.0
  %103 = vmatpush.msra.mxu0 0.0
  %104 = vmatpush.msra.mxu0 0.0
  %105 = vmatpush.msra.mxu0 0.0
  %106 = vmatpush.msra.mxu0 0.0
  %107 = vmatpush.msra.mxu0 0.0
  %108 = vmatpush.msra.mxu0 0.0
  %109 = vmatpush.msra.mxu0 0.0
  %110 = vmatpush.msra.mxu0 0.0
  %111 = vmatpush.msra.mxu0 0.0
  %112 = vmatpush.msra.mxu0 0.0
  %113 = vmatpush.msra.mxu0 0.0
  %114 = vmatpush.msra.mxu0 %v14
  %115 = vmatpush.msra.mxu0 %v13
  %116 = vmatmul.f32.gmra.mxu0 %v98
  %v117 = vpop.f32.mrf.mxu0
  %v118 = vadd.f32 0.0, %v117
  %119 = vdwg.mxu0
  %v120 = vadd.f32 %v73, %v118
  %v121 = vxor.u32 %v120, 2147483648
  %v122 = vmul.f32 %v121, 1.442695
  %v123 = vpow.pop %v122
  %v124 = vadd.f32 %v123, 1.0
  %v125 = vrcp.pop %v124
  %v126 = vmul.f32 %v124, %v125
  %v127 = vsub.f32 1.0, %v126
  %v128 = vmul.f32 %v125, %v127
  %v129 = vadd.f32 %v125, %v128
  %vm130 = vweird.f32 %v124
  %vm131 = vweird.f32 %v125
  %vm132 = vmor %vm130, %vm131
  %v133 = vsel %vm132, %v125, %v129
  %v134 = vand.u32 2147483647, %v124
  %vm135 = vcmp.eq.f32.partialorder %v134, 8.507059e+37
  %v136 = vand.u32 %v124, 2147483648
  %v137 = vor.u32 1.1754944e-38, %v136
  %v138 = vsel %vm135, %v137, %v133
  %v139 = vmul.f32 1.0, %v138
  %v140 = vmul.f32 %v139, 2.0
  %v141 = vsub.f32 %v140, 1.0
  %v142 = vmul.f32 %v139, 0.0
  %144 = vrot.lane.b32.xlu0 %v141, 96
  %v145 = vpop.permute.xlu0 %144
  %v147 = vmul.f32 %v139, %v145
  %149 = vrot.lane.b32.xlu0 %v147, 16
  %v150 = vpop.permute.xlu0 %149
  %v152 = vadd.f32 %v142, %v150
  %v153 = vtanh.pop %v152
  %155 = vrot.lane.b32.xlu0 %v153, 32
  %v156 = vpop.permute.xlu0 %155
  %v158 = vmul.f32 %v139, %v156
  %160 = vrot.lane.b32.xlu0 %v158, 80
  %v161 = vpop.permute.xlu0 %160
  %v162 = vsel %vm96, %v161, 0
  %164 = vmatpush.msra.mxu0 0.0
  %165 = vmatpush.msra.mxu0 0.0
  %166 = vmatpush.msra.mxu0 0.0
  %167 = vmatpush.msra.mxu0 0.0
  %168 = vmatpush.msra.mxu0 0.0
  %169 = vmatpush.msra.mxu0 0.0
  %170 = vmatpush.msra.mxu0 0.0
  %171 = vmatpush.msra.mxu0 0.0
  %172 = vmatpush.msra.mxu0 0.0
  %173 = vmatpush.msra.mxu0 0.0
  %174 = vmatpush.msra.mxu0 0.0
  %175 = vmatpush.msra.mxu0 0.0
  %176 = vmatpush.msra.mxu0 0.0
  %177 = vmatpush.msra.mxu0 0.0
  %178 = vmatpush.msra.mxu0 %v14
  %179 = vmatpush.msra.mxu0 %v13
  %180 = vmatmul.f32.gmra.mxu0 %v162
  %v181 = vpop.f32.mrf.mxu0
  %v182 = vadd.f32 0.0, %v181
  %183 = vdwg.mxu0
  %v184 = vadd.f32 %v76, %v182
  %v185 = vxor.u32 %v184, 2147483648
  %v186 = vmul.f32 %v185, 1.442695
  %v187 = vpow.pop %v186
  %v188 = vadd.f32 %v187, 1.0
  %v189 = vrcp.pop %v188
  %v190 = vmul.f32 %v188, %v189
  %v191 = vsub.f32 1.0, %v190
  %v192 = vmul.f32 %v189, %v191
  %v193 = vadd.f32 %v189, %v192
  %vm194 = vweird.f32 %v188
  %vm195 = vweird.f32 %v189
  %vm196 = vmor %vm194, %vm195
  %v197 = vsel %vm196, %v189, %v193
  %v198 = vand.u32 2147483647, %v188
  %vm199 = vcmp.eq.f32.partialorder %v198, 8.507059e+37
  %v200 = vand.u32 %v188, 2147483648
  %v201 = vor.u32 1.1754944e-38, %v200
  %v202 = vsel %vm199, %v201, %v197
  %v203 = vmul.f32 1.0, %v202
  %v204 = vmul.f32 %v203, 2.0
  %v205 = vsub.f32 %v204, 1.0
  %v206 = vmul.f32 %v203, %v152
  %208 = vrot.lane.b32.xlu0 %v205, 96
  %v209 = vpop.permute.xlu0 %208
  %v211 = vmul.f32 %v203, %v209
  %213 = vrot.lane.b32.xlu0 %v211, 16
  %v214 = vpop.permute.xlu0 %213
  %v216 = vadd.f32 %v206, %v214
  %v217 = vtanh.pop %v216
  %219 = vrot.lane.b32.xlu0 %v217, 32
  %v220 = vpop.permute.xlu0 %219
  %v222 = vmul.f32 %v203, %v220
  %224 = vrot.lane.b32.xlu0 %v222, 80
  %v225 = vpop.permute.xlu0 %224
  %v226 = vsel %vm96, %v225, 0
  %228 = vmatpush.msra.mxu0 0.0
  %229 = vmatpush.msra.mxu0 0.0
  %230 = vmatpush.msra.mxu0 0.0
  %231 = vmatpush.msra.mxu0 0.0
  %232 = vmatpush.msra.mxu0 0.0
  %233 = vmatpush.msra.mxu0 0.0
  %234 = vmatpush.msra.mxu0 0.0
  %235 = vmatpush.msra.mxu0 0.0
  %236 = vmatpush.msra.mxu0 0.0
  %237 = vmatpush.msra.mxu0 0.0
  %238 = vmatpush.msra.mxu0 0.0
  %239 = vmatpush.msra.mxu0 0.0
  %240 = vmatpush.msra.mxu0 0.0
  %241 = vmatpush.msra.mxu0 0.0
  %242 = vmatpush.msra.mxu0 %v14
  %243 = vmatpush.msra.mxu0 %v13
  %244 = vmatmul.f32.gmra.mxu0 %v226
  %v245 = vpop.f32.mrf.mxu0
  %v246 = vadd.f32 0.0, %v245
  %247 = vdwg.mxu0
  %v248 = vadd.f32 %v79, %v246
  %v249 = vxor.u32 %v248, 2147483648
  %v250 = vmul.f32 %v249, 1.442695
  %v251 = vpow.pop %v250
  %v252 = vadd.f32 %v251, 1.0
  %v253 = vrcp.pop %v252
  %v254 = vmul.f32 %v252, %v253
  %v255 = vsub.f32 1.0, %v254
  %v256 = vmul.f32 %v253, %v255
  %v257 = vadd.f32 %v253, %v256
  %vm258 = vweird.f32 %v252
  %vm259 = vweird.f32 %v253
  %vm260 = vmor %vm258, %vm259
  %v261 = vsel %vm260, %v253, %v257
  %v262 = vand.u32 2147483647, %v252
  %vm263 = vcmp.eq.f32.partialorder %v262, 8.507059e+37
  %v264 = vand.u32 %v252, 2147483648
  %v265 = vor.u32 1.1754944e-38, %v264
  %v266 = vsel %vm263, %v265, %v261
  %v267 = vmul.f32 1.0, %v266
  %v268 = vmul.f32 %v267, 2.0
  %v269 = vsub.f32 %v268, 1.0
  %v270 = vmul.f32 %v267, %v216
  %272 = vrot.lane.b32.xlu0 %v269, 96
  %v273 = vpop.permute.xlu0 %272
  %v275 = vmul.f32 %v267, %v273
  %277 = vrot.lane.b32.xlu0 %v275, 16
  %v278 = vpop.permute.xlu0 %277
  %v280 = vadd.f32 %v270, %v278
  %v281 = vtanh.pop %v280
  %283 = vrot.lane.b32.xlu0 %v281, 32
  %v284 = vpop.permute.xlu0 %283
  %v286 = vmul.f32 %v267, %v284
  %288 = vrot.lane.b32.xlu0 %v286, 80
  %v289 = vpop.permute.xlu0 %288
  %v290 = vsel %vm96, %v289, 0
  %292 = vmatpush.msra.mxu0 0.0
  %293 = vmatpush.msra.mxu0 0.0
  %294 = vmatpush.msra.mxu0 0.0
  %295 = vmatpush.msra.mxu0 0.0
  %296 = vmatpush.msra.mxu0 0.0
  %297 = vmatpush.msra.mxu0 0.0
  %298 = vmatpush.msra.mxu0 0.0
  %299 = vmatpush.msra.mxu0 0.0
  %300 = vmatpush.msra.mxu0 0.0
  %301 = vmatpush.msra.mxu0 0.0
  %302 = vmatpush.msra.mxu0 0.0
  %303 = vmatpush.msra.mxu0 0.0
  %304 = vmatpush.msra.mxu0 0.0
  %305 = vmatpush.msra.mxu0 0.0
  %306 = vmatpush.msra.mxu0 %v14
  %307 = vmatpush.msra.mxu0 %v13
  %308 = vmatmul.f32.gmra.mxu0 %v290
  %v309 = vpop.f32.mrf.mxu0
  %v310 = vadd.f32 0.0, %v309
  %311 = vdwg.mxu0
  %v312 = vadd.f32 %v82, %v310
  %v313 = vxor.u32 %v312, 2147483648
  %v314 = vmul.f32 %v313, 1.442695
  %v315 = vpow.pop %v314
  %v316 = vadd.f32 %v315, 1.0
  %v317 = vrcp.pop %v316
  %v318 = vmul.f32 %v316, %v317
  %v319 = vsub.f32 1.0, %v318
  %v320 = vmul.f32 %v317, %v319
  %v321 = vadd.f32 %v317, %v320
  %vm322 = vweird.f32 %v316
  %vm323 = vweird.f32 %v317
  %vm324 = vmor %vm322, %vm323
  %v325 = vsel %vm324, %v317, %v321
  %v326 = vand.u32 2147483647, %v316
  %vm327 = vcmp.eq.f32.partialorder %v326, 8.507059e+37
  %v328 = vand.u32 %v316, 2147483648
  %v329 = vor.u32 1.1754944e-38, %v328
  %v330 = vsel %vm327, %v329, %v325
  %v331 = vmul.f32 1.0, %v330
  %v332 = vmul.f32 %v331, 2.0
  %v333 = vsub.f32 %v332, 1.0
  %v334 = vmul.f32 %v331, %v280
  %336 = vrot.lane.b32.xlu0 %v333, 96
  %v337 = vpop.permute.xlu0 %336
  %v339 = vmul.f32 %v331, %v337
  %341 = vrot.lane.b32.xlu0 %v339, 16
  %v342 = vpop.permute.xlu0 %341
  %v344 = vadd.f32 %v334, %v342
  %v345 = vtanh.pop %v344
  %347 = vrot.lane.b32.xlu0 %v345, 32
  %v348 = vpop.permute.xlu0 %347
  %v350 = vmul.f32 %v331, %v348
  %352 = vrot.lane.b32.xlu0 %v350, 80
  %v353 = vpop.permute.xlu0 %352
  %v354 = vsel %vm96, %v353, 0
  %356 = vmatpush.msra.mxu0 0.0
  %357 = vmatpush.msra.mxu0 0.0
  %358 = vmatpush.msra.mxu0 0.0
  %359 = vmatpush.msra.mxu0 0.0
  %360 = vmatpush.msra.mxu0 0.0
  %361 = vmatpush.msra.mxu0 0.0
  %362 = vmatpush.msra.mxu0 0.0
  %363 = vmatpush.msra.mxu0 0.0
  %364 = vmatpush.msra.mxu0 0.0
  %365 = vmatpush.msra.mxu0 0.0
  %366 = vmatpush.msra.mxu0 0.0
  %367 = vmatpush.msra.mxu0 0.0
  %368 = vmatpush.msra.mxu0 0.0
  %369 = vmatpush.msra.mxu0 0.0
  %370 = vmatpush.msra.mxu0 %v14
  %371 = vmatpush.msra.mxu0 %v13
  %372 = vmatmul.f32.gmra.mxu0 %v354
  %v373 = vpop.f32.mrf.mxu0
  %v374 = vadd.f32 0.0, %v373
  %375 = vdwg.mxu0
  %v376 = vadd.f32 %v85, %v374
  %v377 = vxor.u32 %v376, 2147483648
  %v378 = vmul.f32 %v377, 1.442695
  %v379 = vpow.pop %v378
  %v380 = vadd.f32 %v379, 1.0
  %v381 = vrcp.pop %v380
  %v382 = vmul.f32 %v380, %v381
  %v383 = vsub.f32 1.0, %v382
  %v384 = vmul.f32 %v381, %v383
  %v385 = vadd.f32 %v381, %v384
  %vm386 = vweird.f32 %v380
  %vm387 = vweird.f32 %v381
  %vm388 = vmor %vm386, %vm387
  %v389 = vsel %vm388, %v381, %v385
  %v390 = vand.u32 2147483647, %v380
  %vm391 = vcmp.eq.f32.partialorder %v390, 8.507059e+37
  %v392 = vand.u32 %v380, 2147483648
  %v393 = vor.u32 1.1754944e-38, %v392
  %v394 = vsel %vm391, %v393, %v389
  %v395 = vmul.f32 1.0, %v394
  %v396 = vmul.f32 %v395, 2.0
  %v397 = vsub.f32 %v396, 1.0
  %v398 = vmul.f32 %v395, %v344
  %400 = vrot.lane.b32.xlu0 %v397, 96
  %v401 = vpop.permute.xlu0 %400
  %v403 = vmul.f32 %v395, %v401
  %405 = vrot.lane.b32.xlu0 %v403, 16
  %v406 = vpop.permute.xlu0 %405
  %v408 = vadd.f32 %v398, %v406
  %v409 = vtanh.pop %v408
  %411 = vrot.lane.b32.xlu0 %v409, 32
  %v412 = vpop.permute.xlu0 %411
  %v414 = vmul.f32 %v395, %v412
  %416 = vrot.lane.b32.xlu0 %v414, 80
  %v417 = vpop.permute.xlu0 %416
  %v418 = vsel %vm96, %v417, 0
  %420 = vmatpush.msra.mxu0 0.0
  %421 = vmatpush.msra.mxu0 0.0
  %422 = vmatpush.msra.mxu0 0.0
  %423 = vmatpush.msra.mxu0 0.0
  %424 = vmatpush.msra.mxu0 0.0
  %425 = vmatpush.msra.mxu0 0.0
  %426 = vmatpush.msra.mxu0 0.0
  %427 = vmatpush.msra.mxu0 0.0
  %428 = vmatpush.msra.mxu0 0.0
  %429 = vmatpush.msra.mxu0 0.0
  %430 = vmatpush.msra.mxu0 0.0
  %431 = vmatpush.msra.mxu0 0.0
  %432 = vmatpush.msra.mxu0 0.0
  %433 = vmatpush.msra.mxu0 0.0
  %434 = vmatpush.msra.mxu0 %v14
  %435 = vmatpush.msra.mxu0 %v13
  %436 = vmatmul.f32.gmra.mxu0 %v418
  %v437 = vpop.f32.mrf.mxu0
  %v438 = vadd.f32 0.0, %v437
  %439 = vdwg.mxu0
  %v440 = vadd.f32 %v88, %v438
  %v441 = vxor.u32 %v440, 2147483648
  %v442 = vmul.f32 %v441, 1.442695
  %v443 = vpow.pop %v442
  %v444 = vadd.f32 %v443, 1.0
  %v445 = vrcp.pop %v444
  %v446 = vmul.f32 %v444, %v445
  %v447 = vsub.f32 1.0, %v446
  %v448 = vmul.f32 %v445, %v447
  %v449 = vadd.f32 %v445, %v448
  %vm450 = vweird.f32 %v444
  %vm451 = vweird.f32 %v445
  %vm452 = vmor %vm450, %vm451
  %v453 = vsel %vm452, %v445, %v449
  %v454 = vand.u32 2147483647, %v444
  %vm455 = vcmp.eq.f32.partialorder %v454, 8.507059e+37
  %v456 = vand.u32 %v444, 2147483648
  %v457 = vor.u32 1.1754944e-38, %v456
  %v458 = vsel %vm455, %v457, %v453
  %v459 = vmul.f32 1.0, %v458
  %v460 = vmul.f32 %v459, 2.0
  %v461 = vsub.f32 %v460, 1.0
  %v462 = vmul.f32 %v459, %v408
  %464 = vrot.lane.b32.xlu0 %v461, 96
  %v465 = vpop.permute.xlu0 %464
  %v467 = vmul.f32 %v459, %v465
  %469 = vrot.lane.b32.xlu0 %v467, 16
  %v470 = vpop.permute.xlu0 %469
  %v472 = vadd.f32 %v462, %v470
  %v473 = vtanh.pop %v472
  %475 = vrot.lane.b32.xlu0 %v473, 32
  %v476 = vpop.permute.xlu0 %475
  %v478 = vmul.f32 %v459, %v476
  %480 = vrot.lane.b32.xlu0 %v478, 80
  %v481 = vpop.permute.xlu0 %480
  %v482 = vsel %vm96, %v481, 0
  %484 = vmatpush.msra.mxu0 0.0
  %485 = vmatpush.msra.mxu0 0.0
  %486 = vmatpush.msra.mxu0 0.0
  %487 = vmatpush.msra.mxu0 0.0
  %488 = vmatpush.msra.mxu0 0.0
  %489 = vmatpush.msra.mxu0 0.0
  %490 = vmatpush.msra.mxu0 0.0
  %491 = vmatpush.msra.mxu0 0.0
  %492 = vmatpush.msra.mxu0 0.0
  %493 = vmatpush.msra.mxu0 0.0
  %494 = vmatpush.msra.mxu0 0.0
  %495 = vmatpush.msra.mxu0 0.0
  %496 = vmatpush.msra.mxu0 0.0
  %497 = vmatpush.msra.mxu0 0.0
  %498 = vmatpush.msra.mxu0 %v14
  %499 = vmatpush.msra.mxu0 %v13
  %500 = vmatmul.f32.gmra.mxu0 %v482
  %v501 = vpop.f32.mrf.mxu0
  %v502 = vadd.f32 0.0, %v501
  %503 = vdwg.mxu0
  %v504 = vadd.f32 %v91, %v502
  %v505 = vxor.u32 %v504, 2147483648
  %v506 = vmul.f32 %v505, 1.442695
  %v507 = vpow.pop %v506
  %v508 = vadd.f32 %v507, 1.0
  %v509 = vrcp.pop %v508
  %v510 = vmul.f32 %v508, %v509
  %v511 = vsub.f32 1.0, %v510
  %v512 = vmul.f32 %v509, %v511
  %v513 = vadd.f32 %v509, %v512
  %vm514 = vweird.f32 %v508
  %vm515 = vweird.f32 %v509
  %vm516 = vmor %vm514, %vm515
  %v517 = vsel %vm516, %v509, %v513
  %v518 = vand.u32 2147483647, %v508
  %vm519 = vcmp.eq.f32.partialorder %v518, 8.507059e+37
  %v520 = vand.u32 %v508, 2147483648
  %v521 = vor.u32 1.1754944e-38, %v520
  %v522 = vsel %vm519, %v521, %v517
  %v523 = vmul.f32 1.0, %v522
  %v524 = vmul.f32 %v523, 2.0
  %v525 = vsub.f32 %v524, 1.0
  %v526 = vmul.f32 %v523, %v472
  %528 = vrot.lane.b32.xlu0 %v525, 96
  %v529 = vpop.permute.xlu0 %528
  %v531 = vmul.f32 %v523, %v529
  %533 = vrot.lane.b32.xlu0 %v531, 16
  %v534 = vpop.permute.xlu0 %533
  %v536 = vadd.f32 %v526, %v534
  %v537 = vtanh.pop %v536
  %539 = vrot.lane.b32.xlu0 %v537, 32
  %v540 = vpop.permute.xlu0 %539
  %v542 = vmul.f32 %v523, %v540
  %544 = vrot.lane.b32.xlu0 %v542, 80
  %v545 = vpop.permute.xlu0 %544
  %v546 = vsel %vm96, %v545, 0
  %548 = vmatpush.msra.mxu0 0.0
  %549 = vmatpush.msra.mxu0 0.0
  %550 = vmatpush.msra.mxu0 0.0
  %551 = vmatpush.msra.mxu0 0.0
  %552 = vmatpush.msra.mxu0 0.0
  %553 = vmatpush.msra.mxu0 0.0
  %554 = vmatpush.msra.mxu0 0.0
  %555 = vmatpush.msra.mxu0 0.0
  %556 = vmatpush.msra.mxu0 0.0
  %557 = vmatpush.msra.mxu0 0.0
  %558 = vmatpush.msra.mxu0 0.0
  %559 = vmatpush.msra.mxu0 0.0
  %560 = vmatpush.msra.mxu0 0.0
  %561 = vmatpush.msra.mxu0 0.0
  %562 = vmatpush.msra.mxu0 %v14
  %563 = vmatpush.msra.mxu0 %v13
  %564 = vmatmul.f32.gmra.mxu0 %v546
  %v565 = vpop.f32.mrf.mxu0
  %v566 = vadd.f32 0.0, %v565
  %567 = vdwg.mxu0
  %v568 = vadd.f32 %v94, %v566
  %v569 = vxor.u32 %v568, 2147483648
  %v570 = vmul.f32 %v569, 1.442695
  %v571 = vpow.pop %v570
  %v572 = vadd.f32 %v571, 1.0
  %v573 = vrcp.pop %v572
  %v574 = vmul.f32 %v572, %v573
  %v575 = vsub.f32 1.0, %v574
  %v576 = vmul.f32 %v573, %v575
  %v577 = vadd.f32 %v573, %v576
  %vm578 = vweird.f32 %v572
  %vm579 = vweird.f32 %v573
  %vm580 = vmor %vm578, %vm579
  %v581 = vsel %vm580, %v573, %v577
  %v582 = vand.u32 2147483647, %v572
  %vm583 = vcmp.eq.f32.partialorder %v582, 8.507059e+37
  %v584 = vand.u32 %v572, 2147483648
  %v585 = vor.u32 1.1754944e-38, %v584
  %v586 = vsel %vm583, %v585, %v581
  %v587 = vmul.f32 1.0, %v586
  %v588 = vmul.f32 %v587, 2.0
  %v589 = vsub.f32 %v588, 1.0
  %v590 = vmul.f32 %v587, %v536
  %592 = vrot.lane.b32.xlu0 %v589, 96
  %v593 = vpop.permute.xlu0 %592
  %v595 = vmul.f32 %v587, %v593
  %597 = vrot.lane.b32.xlu0 %v595, 16
  %v598 = vpop.permute.xlu0 %597
  %v600 = vadd.f32 %v590, %v598
  %v601 = vtanh.pop %v600
  %603 = vrot.lane.b32.xlu0 %v601, 32
  %v604 = vpop.permute.xlu0 %603
  %v606 = vmul.f32 %v587, %v604
  %v607 = vperm.slane %v15, 0
  %609 = vrot.lane.b32.xlu0 %v607, 48
  %v610 = vpop.permute.xlu0 %609
  %v612 = vmul.f32 %v606, %v610
  %614 = vrot.lane.b32.xlu0 %v612, 80
  %v615 = vpop.permute.xlu0 %614
  %v617 = vsel %vm96, %v615, 0.0
  %618 = vadd.xlane.f32.xlu0 %v617
  %v619 = vpop.xlane.xlu0 %618
  %v620 = vperm.slane %v16, 0
  %v621 = vadd.f32 %v619, %v620
  %vm622 = vcmask 1024
  %623 = vst.msk [vmem:[%s2] sm:$0x3] %vm622, %v621
  // Predicated region
  $region10: #{basic_lstm2_forward.1} parent=0 // pred_check
    _
  $region11: #{basic_lstm2_forward.1} parent=0 // pred_check_branch
    %625 = sbr.rel (0) target = $region13
  $region12: #{basic_lstm2_forward.1} parent=0 // pred_region
    _
  $region13: #{basic_lstm2_forward.1} parent=0 // pred_fallthru
    _
  // Predicated region
  $region14: #{basic_lstm2_forward.1} parent=0 // pred_check
    _
  $region15: #{basic_lstm2_forward.1} parent=0 // pred_check_branch
    %627 = sbr.rel (0) target = $region17
  $region16: #{basic_lstm2_forward.1} parent=0 // pred_region
    _
  $region17: #{basic_lstm2_forward.1} parent=0 // pred_fallthru
    _

</llo_original>
